<compile_context>
chip_gen: v7x
topology: tpu7x:2x2x1
jax: 0.10.0
libtpu: 0.0.40
codegen_flags: <defaults>
</compile_context>

<pallas_src>
import jax
import jax.numpy as jnp
from jax.experimental import pallas as pl
from jax.experimental.pallas import tpu as pltpu

# ---- small shapes consistent with GraphGNN(device, in_dim, out_dim) ----
B = 2          # batch
N_NODES = 16   # number of graph nodes  (x.size(1))
E = 32         # number of edges
IN_DIM = 8     # in_dim
E_H = 32       # edge_mlp hidden (fixed to 32 in the module)
E_OUT = 30     # edge_mlp output (fixed to 30 in the module)
OUT_DIM = 16   # node_mlp output (out_dim)

BN = B * N_NODES   # folded node rows
BE = B * E         # folded edge rows


def gnn_kernel(x_ref, s2_ref, st_diff_ref, w1st_ref, ew_term_ref,
               w2_ref, w3_ref, b23_ref, o_ref):
    x = x_ref[...]                                                           # (BN, D)

    # Project-then-gather: two tiny projections stacked along sublanes so the merged
    # block-diagonal selector performs BOTH gathers with a single K=2*BN MXU push.
    xs = jnp.dot(x, w1st_ref[0:IN_DIM], preferred_element_type=jnp.float32)           # (BN, E_H)
    xt = jnp.dot(x, w1st_ref[IN_DIM:2 * IN_DIM], preferred_element_type=jnp.float32)  # (BN, E_H)
    x2 = jnp.concatenate([xs, xt], axis=0)                                   # (2*BN, E_H)

    # gather-as-matmul + precomputed (edge_w * W1_edge_row + b1) term
    h = jnp.dot(s2_ref[...], x2, preferred_element_type=jnp.float32) + ew_term_ref[...]
    h = jax.nn.sigmoid(h)                                                    # (BE, E_H)
    h = jax.nn.sigmoid(
        jnp.dot(h, w2_ref[...], preferred_element_type=jnp.float32)
        + b23_ref[0:1, :])                                                   # (BE, E_OUT)

    # scatter_add(h, tgt) - scatter_add(h, src) as one signed block-diag matmul
    agg = jnp.dot(st_diff_ref[...], h, preferred_element_type=jnp.float32)   # (BN, E_OUT)
    o_ref[...] = jax.nn.sigmoid(
        jnp.dot(agg, w3_ref[...], preferred_element_type=jnp.float32)
        + b23_ref[1:2, 0:OUT_DIM])                                           # (BN, OUT_DIM)


def make_graph_gnn_forward(edge_src_target, edge_weight, params):
    """One-time (per fixed graph + weights) prep; returns a jitted forward(x)."""
    W1, b1, W2, b2, W3, b3 = params
    D = IN_DIM
    edge_src = edge_src_target[0]
    edge_tgt = edge_src_target[1]

    # --- fixed-graph constants (built ONCE, closed over by the jitted forward) ---
    node_off = (jnp.arange(B, dtype=jnp.int32) * N_NODES)[:, None]           # (B, 1)
    src_flat = (node_off + edge_src[None, :]).reshape(-1)                    # (BE,)
    tgt_flat = (node_off + edge_tgt[None, :]).reshape(-1)                    # (BE,)
    s_src = jax.nn.one_hot(src_flat, BN, dtype=jnp.float32)                  # (BE, BN)
    s_tgt = jax.nn.one_hot(tgt_flat, BN, dtype=jnp.float32)                  # (BE, BN)
    s2 = jnp.concatenate([s_src, s_tgt], axis=1)                             # (BE, 2*BN)
    st_diff = (s_tgt - s_src).T                                              # (BN, BE)

    # edge-weight + bias contribution of the first edge-MLP layer (x-independent)
    ew_flat = jnp.tile(edge_weight.astype(jnp.float32), B)                   # (BE,)
    ew_term = ew_flat[:, None] * W1[2 * D][None, :] + b1[None, :]            # (BE, E_H)

    w1st = W1[:2 * D]                                                        # (2D, E_H)
    b23 = jnp.zeros((2, E_OUT), jnp.float32)                                 # packed biases
    b23 = b23.at[0, :].set(b2)
    b23 = b23.at[1, :OUT_DIM].set(b3)

    flops = (2 * 2 * BN * D * E_H            # xs, xt projections
             + 2 * BE * (2 * BN) * E_H       # merged gather matmul
             + 2 * BE * E_H * E_OUT          # edge-MLP layer 2
             + 2 * BN * BE * E_OUT           # signed scatter matmul
             + 2 * BN * E_OUT * OUT_DIM)     # node MLP
    transcendentals = BE * E_H + BE * E_OUT + BN * OUT_DIM
    bytes_accessed = 4 * (BN * D + s2.size + st_diff.size + w1st.size + ew_term.size
                          + W2.size + W3.size + b23.size + BN * OUT_DIM)

    vmem = pl.BlockSpec(memory_space=pltpu.MemorySpace.VMEM)
    call = pl.pallas_call(
        gnn_kernel,
        out_shape=jax.ShapeDtypeStruct((BN, OUT_DIM), jnp.float32),
        in_specs=[vmem] * 8,
        out_specs=vmem,
        cost_estimate=pl.CostEstimate(flops=flops,
                                      transcendentals=transcendentals,
                                      bytes_accessed=bytes_accessed),
    )

    @jax.jit
    def forward(x):
        x_flat = x.reshape(BN, D).astype(jnp.float32)
        out = call(x_flat, s2, st_diff, w1st, ew_term, W2, W3, b23)
        return out.reshape(B, N_NODES, OUT_DIM)

    return forward


def reference_forward(x, edge_src_target, edge_weight, params):
    """Literal pure-JAX translation of the PyTorch forward (f32 highest precision)."""
    W1, b1, W2, b2, W3, b3 = params
    pp = jax.lax.Precision.HIGHEST
    edge_src, edge_tgt = edge_src_target[0], edge_src_target[1]

    node_src = x[:, edge_src]                                        # (B, E, D)
    node_tgt = x[:, edge_tgt]                                        # (B, E, D)
    ew = jnp.broadcast_to(edge_weight[None, :, None], (x.shape[0], E, 1))
    feat = jnp.concatenate([node_src, node_tgt, ew], axis=-1)        # (B, E, 2D+1)

    h = jax.nn.sigmoid(jnp.matmul(feat, W1, precision=pp) + b1)
    h = jax.nn.sigmoid(jnp.matmul(h, W2, precision=pp) + b2)         # (B, E, E_OUT)

    zeros = jnp.zeros((x.shape[0], x.shape[1], h.shape[-1]), h.dtype)
    out_add = zeros.at[:, edge_tgt, :].add(h)
    out_sub = zeros.at[:, edge_src, :].add(-h)
    agg = out_add + out_sub                                          # (B, N, E_OUT)
    return jax.nn.sigmoid(jnp.matmul(agg, W3, precision=pp) + b3)


def init_params(key):
    ks = jax.random.split(key, 6)
    s = 0.2
    W1 = (jax.random.normal(ks[0], (2 * IN_DIM + 1, E_H)) * s).astype(jnp.float32)
    b1 = (jax.random.normal(ks[1], (E_H,)) * s).astype(jnp.float32)
    W2 = (jax.random.normal(ks[2], (E_H, E_OUT)) * s).astype(jnp.float32)
    b2 = (jax.random.normal(ks[3], (E_OUT,)) * s).astype(jnp.float32)
    W3 = (jax.random.normal(ks[4], (E_OUT, OUT_DIM)) * s).astype(jnp.float32)
    b3 = (jax.random.normal(ks[5], (OUT_DIM,)) * s).astype(jnp.float32)
    return (W1, b1, W2, b2, W3, b3)


if __name__ == "__main__":
    key = jax.random.PRNGKey(0)
    kx, ks, kt, kw, kp = jax.random.split(key, 5)

    x = jax.random.normal(kx, (B, N_NODES, IN_DIM), dtype=jnp.float32)
    edge_src = jax.random.randint(ks, (E,), 0, N_NODES, dtype=jnp.int32)
    edge_tgt = jax.random.randint(kt, (E,), 0, N_NODES, dtype=jnp.int32)
    edge_src_target = jnp.stack([edge_src, edge_tgt], axis=0)        # (2, E)
    edge_weight = jax.random.uniform(kw, (E,), dtype=jnp.float32)
    params = init_params(kp)

    # Fixed-graph prep runs once here; the returned forward only touches x.
    forward = make_graph_gnn_forward(edge_src_target, edge_weight, params)

    out = forward(x)
    out = jax.block_until_ready(out)

    ref = reference_forward(x, edge_src_target, edge_weight, params)
    assert out.shape == (B, N_NODES, OUT_DIM)
    assert jnp.allclose(out, ref, atol=1e-4, rtol=1e-4), "mismatch vs reference"

    print("KERNEL_OK")
</pallas_src>

<mosaic_0001>
module attributes {stable_mosaic.version = 11 : i64} {
  func.func @gnn_kernel(%arg0: memref<32x8xf32, #tpu.memory_space<vmem>>, %arg1: memref<64x64xf32, #tpu.memory_space<vmem>>, %arg2: memref<32x64xf32, #tpu.memory_space<vmem>>, %arg3: memref<16x32xf32, #tpu.memory_space<vmem>>, %arg4: memref<64x32xf32, #tpu.memory_space<vmem>>, %arg5: memref<32x30xf32, #tpu.memory_space<vmem>>, %arg6: memref<30x16xf32, #tpu.memory_space<vmem>>, %arg7: memref<2x30xf32, #tpu.memory_space<vmem>>, %arg8: memref<32x16xf32, #tpu.memory_space<vmem>>) attributes {dimension_semantics = [], scalar_prefetch = 0 : i64, scratch_operands = 0 : i64, tpu.core_type = #tpu.core_type<tc>} {
    %c0 = arith.constant 0 : index
    %c0_0 = arith.constant 0 : index
    %0 = vector.load %arg0[%c0, %c0_0] : memref<32x8xf32, #tpu.memory_space<vmem>>, vector<32x8xf32>
    %c0_1 = arith.constant 0 : index
    %c0_2 = arith.constant 0 : index
    %1 = vector.load %arg3[%c0_1, %c0_2] : memref<16x32xf32, #tpu.memory_space<vmem>>, vector<8x32xf32>
    %cst = arith.constant dense<0.000000e+00> : vector<32x32xf32>
    %2 = tpu.matmul %0, %1, %cst {dimension_numbers = #tpu.dot_dimension_numbers<[1], [0], [0], [1], [0, 0, 1, 1], [], []>} : vector<32x8xf32>, vector<8x32xf32>, vector<32x32xf32> -> vector<32x32xf32>
    %c8 = arith.constant 8 : index
    %c0_3 = arith.constant 0 : index
    %3 = vector.load %arg3[%c8, %c0_3] : memref<16x32xf32, #tpu.memory_space<vmem>>, vector<8x32xf32>
    %cst_4 = arith.constant dense<0.000000e+00> : vector<32x32xf32>
    %4 = tpu.matmul %0, %3, %cst_4 {dimension_numbers = #tpu.dot_dimension_numbers<[1], [0], [0], [1], [0, 0, 1, 1], [], []>} : vector<32x8xf32>, vector<8x32xf32>, vector<32x32xf32> -> vector<32x32xf32>
    %5 = tpu.concatenate %2, %4 in 0 : vector<32x32xf32>, vector<32x32xf32> -> vector<64x32xf32>
    %c0_5 = arith.constant 0 : index
    %c0_6 = arith.constant 0 : index
    %6 = vector.load %arg1[%c0_5, %c0_6] : memref<64x64xf32, #tpu.memory_space<vmem>>, vector<64x64xf32>
    %cst_7 = arith.constant dense<0.000000e+00> : vector<64x32xf32>
    %7 = tpu.matmul %6, %5, %cst_7 {dimension_numbers = #tpu.dot_dimension_numbers<[1], [0], [0], [1], [0, 0, 1, 1], [], []>} : vector<64x64xf32>, vector<64x32xf32>, vector<64x32xf32> -> vector<64x32xf32>
    %c0_8 = arith.constant 0 : index
    %c0_9 = arith.constant 0 : index
    %8 = vector.load %arg4[%c0_8, %c0_9] : memref<64x32xf32, #tpu.memory_space<vmem>>, vector<64x32xf32>
    %9 = arith.addf %7, %8 : vector<64x32xf32>
    %10 = arith.negf %9 : vector<64x32xf32>
    %11 = math.exp %10 : vector<64x32xf32>
    %cst_10 = arith.constant 1.000000e+00 : f32
    %12 = vector.broadcast %cst_10 : f32 to vector<64x32xf32>
    %13 = arith.addf %12, %11 : vector<64x32xf32>
    %14 = arith.divf %12, %13 : vector<64x32xf32>
    %c0_11 = arith.constant 0 : index
    %c0_12 = arith.constant 0 : index
    %15 = vector.load %arg5[%c0_11, %c0_12] : memref<32x30xf32, #tpu.memory_space<vmem>>, vector<32x30xf32>
    %cst_13 = arith.constant dense<0.000000e+00> : vector<64x30xf32>
    %16 = tpu.matmul %14, %15, %cst_13 {dimension_numbers = #tpu.dot_dimension_numbers<[1], [0], [0], [1], [0, 0, 1, 1], [], []>} : vector<64x32xf32>, vector<32x30xf32>, vector<64x30xf32> -> vector<64x30xf32>
    %c0_14 = arith.constant 0 : index
    %c0_15 = arith.constant 0 : index
    %17 = vector.load %arg7[%c0_14, %c0_15] : memref<2x30xf32, #tpu.memory_space<vmem>>, vector<1x30xf32>
    %18 = vector.broadcast %17 : vector<1x30xf32> to vector<64x30xf32>
    %19 = arith.addf %16, %18 : vector<64x30xf32>
    %20 = arith.negf %19 : vector<64x30xf32>
    %21 = math.exp %20 : vector<64x30xf32>
    %cst_16 = arith.constant 1.000000e+00 : f32
    %22 = vector.broadcast %cst_16 : f32 to vector<64x30xf32>
    %23 = arith.addf %22, %21 : vector<64x30xf32>
    %24 = arith.divf %22, %23 : vector<64x30xf32>
    %c0_17 = arith.constant 0 : index
    %c0_18 = arith.constant 0 : index
    %25 = vector.load %arg2[%c0_17, %c0_18] : memref<32x64xf32, #tpu.memory_space<vmem>>, vector<32x64xf32>
    %cst_19 = arith.constant dense<0.000000e+00> : vector<32x30xf32>
    %26 = tpu.matmul %25, %24, %cst_19 {dimension_numbers = #tpu.dot_dimension_numbers<[1], [0], [0], [1], [0, 0, 1, 1], [], []>} : vector<32x64xf32>, vector<64x30xf32>, vector<32x30xf32> -> vector<32x30xf32>
    %c0_20 = arith.constant 0 : index
    %c0_21 = arith.constant 0 : index
    %27 = vector.load %arg6[%c0_20, %c0_21] : memref<30x16xf32, #tpu.memory_space<vmem>>, vector<30x16xf32>
    %cst_22 = arith.constant dense<0.000000e+00> : vector<32x16xf32>
    %28 = tpu.matmul %26, %27, %cst_22 {dimension_numbers = #tpu.dot_dimension_numbers<[1], [0], [0], [1], [0, 0, 1, 1], [], []>} : vector<32x30xf32>, vector<30x16xf32>, vector<32x16xf32> -> vector<32x16xf32>
    %c1 = arith.constant 1 : index
    %c0_23 = arith.constant 0 : index
    %29 = vector.load %arg7[%c1, %c0_23] : memref<2x30xf32, #tpu.memory_space<vmem>>, vector<1x16xf32>
    %30 = vector.broadcast %29 : vector<1x16xf32> to vector<32x16xf32>
    %31 = arith.addf %28, %30 : vector<32x16xf32>
    %32 = arith.negf %31 : vector<32x16xf32>
    %33 = math.exp %32 : vector<32x16xf32>
    %cst_24 = arith.constant 1.000000e+00 : f32
    %34 = vector.broadcast %cst_24 : f32 to vector<32x16xf32>
    %35 = arith.addf %34, %33 : vector<32x16xf32>
    %36 = arith.divf %34, %35 : vector<32x16xf32>
    %c0_25 = arith.constant 0 : index
    %c0_26 = arith.constant 0 : index
    %37 = vector.load %arg8[%c0_25, %c0_26] : memref<32x16xf32, #tpu.memory_space<vmem>>, vector<32x16xf32>
    tpu.vector_store %arg8[%c0_25, %c0_26], %36 {strides = array<i32>} : memref<32x16xf32, #tpu.memory_space<vmem>>, vector<32x16xf32>,
    return
  }
}

</mosaic_0001>

<llo_original>
// kernel: forward.1
$region0: #{forward.1}
  #allocation0 [shape = 'u32[]', space=smem, size = 0x4, offset = 0x4, fixed_abs, tag = 'smem constant byte address 0x4 - core index']
  #allocation1 [shape = 'u32[144,128]{1,0:T(1,128)}', space=vmem, size = 0x12000, scoped, tag = 'internal scratch']
  %s0 = inlined_call_operand.vmem [shape: f32[32,8], index: 0, kind: input, shape index: {}]
  %s1 = inlined_call_operand.hbm [shape: f32[64,64], index: 1, kind: input, shape index: {}]
  %s2 = inlined_call_operand.hbm [shape: f32[32,64], index: 2, kind: input, shape index: {}]
  %s3 = inlined_call_operand.hbm [shape: f32[16,32], index: 3, kind: input, shape index: {}]
  %s4 = inlined_call_operand.vmem [shape: f32[64,32], index: 4, kind: input, shape index: {}]
  %s5 = inlined_call_operand.hbm [shape: f32[32,30], index: 5, kind: input, shape index: {}]
  %s6 = inlined_call_operand.hbm [shape: f32[30,16], index: 6, kind: input, shape index: {}]
  %s7 = inlined_call_operand.vmem [shape: f32[2,30], index: 7, kind: input, shape index: {}]
  %s8 = inlined_call_operand.hbm [shape: f32[32,16], index: 8, kind: output, shape index: {}]
  %s9 = sld [smem:[#allocation0]]
  $region62: #{forward.1} parent=0
    _
  %s11 = ssub.s32 1, %s9
  %s12 = scalar_select 0, %s11, %s9
  $region1: #{forward.1} parent=0
    #allocation2 [shape = 'u8[32768]{0}', space=vmem, size = 0x8000, scoped, tag = 'input window, operand 1, single buffered']
    #allocation3 [shape = 's32[1]{0}', space=sflag, size = 0x4, scoped, tag = 'scoped memory for forward.1']
    #allocation4 [shape = 's32[1]{0}', space=sflag, size = 0x4, scoped, tag = 'scoped memory for forward.1']
    #allocation5 [shape = 'u8[16384]{0}', space=vmem, size = 0x4000, scoped, tag = 'input window, operand 2, single buffered']
    #allocation6 [shape = 's32[1]{0}', space=sflag, size = 0x4, scoped, tag = 'scoped memory for forward.1']
    #allocation7 [shape = 'u8[8192]{0}', space=vmem, size = 0x2000, scoped, tag = 'input window, operand 3, single buffered']
    #allocation8 [shape = 'u8[16384]{0}', space=vmem, size = 0x4000, scoped, tag = 'input window, operand 5, single buffered']
    #allocation9 [shape = 's32[1]{0}', space=sflag, size = 0x4, scoped, tag = 'scoped memory for forward.1']
    #allocation10 [shape = 'u8[16384]{0}', space=vmem, size = 0x4000, scoped, tag = 'input window, operand 6, single buffered']
    #allocation11 [shape = 'u8[16384]{0}', space=vmem, size = 0x4000, scoped, tag = 'output window, operand 0, single buffered']
    %13 = vsyncpa [#allocation3], 0
    %14 = vsyncpa [#allocation6], 0
    %15 = vsyncpa [#allocation9], 0
    %16 = vsyncpa [#allocation4], 0
    // Predicated region
    $region2: #{forward.1} parent=1 // pred_check
      _
    $region3: #{forward.1} parent=1 // pred_check_branch
      %18 = sbr.rel (0) target = $region5
    $region4: #{forward.1} parent=1 // pred_region
      _
    $region5: #{forward.1} parent=1 // pred_fallthru
      _
    // Predicated region
    $region6: #{forward.1} parent=1 // pred_check
      _
    $region7: #{forward.1} parent=1 // pred_check_branch
      %20 = sbr.rel (0) target = $region9
    $region8: #{forward.1} parent=1 // pred_region
      %s22 = ssub.s32 1024, 1024
      %23 = vsyncadd [#allocation3], %s22
      %s24 = sshll.u32 [#allocation2], 4
      %s25 = int_to_ptr.vmem [resolvable:$true] %s24
      %30 = dma.hbm_to_vmem [thread:$0]  %s1, 1024, %s25, [#allocation3], 128, 128, 8
    $region9: #{forward.1} parent=1 // pred_fallthru
      _
    // Predicated region
    $region10: #{forward.1} parent=1 // pred_check
      _
    $region11: #{forward.1} parent=1 // pred_check_branch
      %32 = sbr.rel (0) target = $region13
    $region12: #{forward.1} parent=1 // pred_region
      %s34 = ssub.s32 512, 512
      %35 = vsyncadd [#allocation6], %s34
      %s36 = sshll.u32 [#allocation5], 4
      %s37 = int_to_ptr.vmem [resolvable:$true] %s36
      %42 = dma.hbm_to_vmem [thread:$0]  %s2, 512, %s37, [#allocation6], 128, 128, 8
    $region13: #{forward.1} parent=1 // pred_fallthru
      _
    // Predicated region
    $region14: #{forward.1} parent=1 // pred_check
      _
    $region15: #{forward.1} parent=1 // pred_check_branch
      %44 = sbr.rel (0) target = $region17
    $region16: #{forward.1} parent=1 // pred_region
      %s46 = ssub.s32 256, 256
      %47 = vsyncadd [#allocation6], %s46
      %s48 = sshll.u32 [#allocation7], 4
      %s49 = int_to_ptr.vmem [resolvable:$true] %s48
      %54 = dma.hbm_to_vmem [thread:$0]  %s3, 256, %s49, [#allocation6], 128, 128, 8
    $region17: #{forward.1} parent=1 // pred_fallthru
      _
    // Predicated region
    $region18: #{forward.1} parent=1 // pred_check
      _
    $region19: #{forward.1} parent=1 // pred_check_branch
      %56 = sbr.rel (0) target = $region21
    $region20: #{forward.1} parent=1 // pred_region
      _
    $region21: #{forward.1} parent=1 // pred_fallthru
      _
    // Predicated region
    $region22: #{forward.1} parent=1 // pred_check
      _
    $region23: #{forward.1} parent=1 // pred_check_branch
      %58 = sbr.rel (0) target = $region25
    $region24: #{forward.1} parent=1 // pred_region
      %s60 = ssub.s32 512, 512
      %61 = vsyncadd [#allocation9], %s60
      %s62 = sshll.u32 [#allocation8], 4
      %s63 = int_to_ptr.vmem [resolvable:$true] %s62
      %68 = dma.hbm_to_vmem [thread:$0]  %s5, 512, %s63, [#allocation9], 128, 128, 8
    $region25: #{forward.1} parent=1 // pred_fallthru
      _
    // Predicated region
    $region26: #{forward.1} parent=1 // pred_check
      _
    $region27: #{forward.1} parent=1 // pred_check_branch
      %70 = sbr.rel (0) target = $region29
    $region28: #{forward.1} parent=1 // pred_region
      %s72 = ssub.s32 512, 512
      %73 = vsyncadd [#allocation9], %s72
      %s74 = sshll.u32 [#allocation10], 4
      %s75 = int_to_ptr.vmem [resolvable:$true] %s74
      %80 = dma.hbm_to_vmem [thread:$0]  %s6, 512, %s75, [#allocation9], 128, 128, 8
    $region29: #{forward.1} parent=1 // pred_fallthru
      _
    // Predicated region
    $region30: #{forward.1} parent=1 // pred_check
      _
    $region31: #{forward.1} parent=1 // pred_check_branch
      %82 = sbr.rel (0) target = $region33
    $region32: #{forward.1} parent=1 // pred_region
      _
    $region33: #{forward.1} parent=1 // pred_fallthru
      _
    // Predicated region
    $region34: #{forward.1} parent=1 // pred_check
      _
    $region35: #{forward.1} parent=1 // pred_check_branch
      %84 = sbr.rel (0) target = $region37
    $region36: #{forward.1} parent=1 // pred_region
      %85 = dma.done [#allocation3], 1024
    $region37: #{forward.1} parent=1 // pred_fallthru
      _
    // Predicated region
    $region38: #{forward.1} parent=1 // pred_check
      _
    $region39: #{forward.1} parent=1 // pred_check_branch
      %87 = sbr.rel (0) target = $region41
    $region40: #{forward.1} parent=1 // pred_region
      %88 = dma.done [#allocation6], 512
    $region41: #{forward.1} parent=1 // pred_fallthru
      _
    // Predicated region
    $region42: #{forward.1} parent=1 // pred_check
      _
    $region43: #{forward.1} parent=1 // pred_check_branch
      %90 = sbr.rel (0) target = $region45
    $region44: #{forward.1} parent=1 // pred_region
      %91 = dma.done [#allocation6], 256
    $region45: #{forward.1} parent=1 // pred_fallthru
      _
    // Predicated region
    $region46: #{forward.1} parent=1 // pred_check
      _
    $region47: #{forward.1} parent=1 // pred_check_branch
      %93 = sbr.rel (0) target = $region49
    $region48: #{forward.1} parent=1 // pred_region
      %94 = dma.done [#allocation9], 512
    $region49: #{forward.1} parent=1 // pred_fallthru
      _
    // Predicated region
    $region50: #{forward.1} parent=1 // pred_check
      _
    $region51: #{forward.1} parent=1 // pred_check_branch
      %96 = sbr.rel (0) target = $region53
    $region52: #{forward.1} parent=1 // pred_region
      %97 = dma.done [#allocation9], 512
    $region53: #{forward.1} parent=1 // pred_fallthru
      _
    %v98 = vld [vmem:[%s0] sm:$0xff]
    %v99 = vld [vmem:[%s0 + $0x8] sm:$0xff]
    %v100 = vld [vmem:[%s0 + $0x10] sm:$0xff]
    %v101 = vld [vmem:[%s0 + $0x18] sm:$0xff]
    %v102 = vld [vmem:[#allocation7] sm:$0xff]
    %vm103 = vcmask 64512
    %v105 = vsel %vm103, %v98, 0
    %v108 = vsel %vm103, %v99, 0
    %v111 = vsel %vm103, %v100, 0
    %v114 = vsel %vm103, %v101, 0
    %116 = vmatprep.subr.mxu0 0.0
    %117 = vmatpush1.msra.mxu0 %v102
    %118 = vmatprep.subr.mxu0 0.0
    %119 = vmatpush1.msra.mxu0 0.0
    %120 = vmatprep.subr.mxu0 0.0
    %121 = vmatpush1.msra.mxu0 0.0
    %122 = vmatprep.subr.mxu0 0.0
    %123 = vmatpush1.msra.mxu0 0.0
    %124 = vmatprep.subr.mxu0 0.0
    %125 = vmatpush1.msra.mxu0 0.0
    %126 = vmatprep.subr.mxu0 0.0
    %127 = vmatpush1.msra.mxu0 0.0
    %128 = vmatprep.subr.mxu0 0.0
    %129 = vmatpush1.msra.mxu0 0.0
    %130 = vmatprep.subr.mxu0 0.0
    %131 = vmatpush1.msra.mxu0 0.0
    %132 = vmatprep.subr.mxu0 0.0
    %133 = vmatpush1.msra.mxu0 0.0
    %134 = vmatprep.subr.mxu0 0.0
    %135 = vmatpush1.msra.mxu0 0.0
    %136 = vmatprep.subr.mxu0 0.0
    %137 = vmatpush1.msra.mxu0 0.0
    %138 = vmatprep.subr.mxu0 0.0
    %139 = vmatpush1.msra.mxu0 0.0
    %140 = vmatprep.subr.mxu0 0.0
    %141 = vmatpush1.msra.mxu0 0.0
    %142 = vmatprep.subr.mxu0 0.0
    %143 = vmatpush1.msra.mxu0 0.0
    %144 = vmatprep.subr.mxu0 0.0
    %145 = vmatpush1.msra.mxu0 0.0
    %146 = vmatprep.subr.mxu0 0.0
    %147 = vmatpush1.msra.mxu0 0.0
    %148 = vmatprep.subr.mxu0 0.0
    %149 = vmatpush1.msra.mxu0 0.0
    %150 = vmatprep.subr.mxu0 0.0
    %151 = vmatpush1.msra.mxu0 0.0
    %152 = vmatprep.subr.mxu0 0.0
    %153 = vmatpush1.msra.mxu0 0.0
    %154 = vmatprep.subr.mxu0 0.0
    %155 = vmatpush1.msra.mxu0 0.0
    %156 = vmatprep.subr.mxu0 0.0
    %157 = vmatpush1.msra.mxu0 0.0
    %158 = vmatprep.subr.mxu0 0.0
    %159 = vmatpush1.msra.mxu0 0.0
    %160 = vmatprep.subr.mxu0 0.0
    %161 = vmatpush1.msra.mxu0 0.0
    %162 = vmatprep.subr.mxu0 0.0
    %163 = vmatpush1.msra.mxu0 0.0
    %164 = vmatprep.subr.mxu0 0.0
    %165 = vmatpush1.msra.mxu0 0.0
    %166 = vmatprep.subr.mxu0 0.0
    %167 = vmatpush1.msra.mxu0 0.0
    %168 = vmatprep.subr.mxu0 0.0
    %169 = vmatpush1.msra.mxu0 0.0
    %170 = vmatprep.subr.mxu0 0.0
    %171 = vmatpush1.msra.mxu0 0.0
    %172 = vmatprep.subr.mxu0 0.0
    %173 = vmatpush1.msra.mxu0 0.0
    %174 = vmatprep.subr.mxu0 0.0
    %175 = vmatpush1.msra.mxu0 0.0
    %176 = vmatprep.subr.mxu0 0.0
    %177 = vmatpush1.msra.mxu0 0.0
    %178 = vmatprep.subr.mxu0 0.0
    %179 = vmatpush1.msra.mxu0 0.0
    %180 = vmatprep.mubr.f32.mxu0 0.0
    %181 = vmatmul.mubr.f32.gmra.mrb[0].mxu0 %v105
    %v182 = vpop.f32.mrb[0].mxu0
    %v183 = vadd.f32 0.0, %v182
    %v184 = vpop.f32.mrb[0].mxu0
    %185 = vmatprep.mubr.f32.mxu0 0.0
    %186 = vmatmul.mubr.f32.gmra.mrb[0].mxu0 %v108
    %v187 = vpop.f32.mrb[0].mxu0
    %v188 = vadd.f32 0.0, %v187
    %v189 = vpop.f32.mrb[0].mxu0
    %190 = vmatprep.mubr.f32.mxu0 0.0
    %191 = vmatmul.mubr.f32.gmra.mrb[0].mxu0 %v111
    %v192 = vpop.f32.mrb[0].mxu0
    %v193 = vadd.f32 0.0, %v192
    %v194 = vpop.f32.mrb[0].mxu0
    %195 = vmatprep.mubr.f32.mxu0 0.0
    %196 = vmatmul.mubr.f32.gmra.mrb[0].mxu0 %v114
    %v197 = vpop.f32.mrb[0].mxu0
    %v198 = vadd.f32 0.0, %v197
    %v199 = vpop.f32.mrb[0].mxu0
    %200 = vdwg.mxu0
    %v201 = vld [vmem:[#allocation7 + $0x8] sm:$0xff]
    %202 = vmatprep.subr.mxu0 0.0
    %203 = vmatpush1.msra.mxu0 %v201
    %204 = vmatprep.subr.mxu0 0.0
    %205 = vmatpush1.msra.mxu0 0.0
    %206 = vmatprep.subr.mxu0 0.0
    %207 = vmatpush1.msra.mxu0 0.0
    %208 = vmatprep.subr.mxu0 0.0
    %209 = vmatpush1.msra.mxu0 0.0
    %210 = vmatprep.subr.mxu0 0.0
    %211 = vmatpush1.msra.mxu0 0.0
    %212 = vmatprep.subr.mxu0 0.0
    %213 = vmatpush1.msra.mxu0 0.0
    %214 = vmatprep.subr.mxu0 0.0
    %215 = vmatpush1.msra.mxu0 0.0
    %216 = vmatprep.subr.mxu0 0.0
    %217 = vmatpush1.msra.mxu0 0.0
    %218 = vmatprep.subr.mxu0 0.0
    %219 = vmatpush1.msra.mxu0 0.0
    %220 = vmatprep.subr.mxu0 0.0
    %221 = vmatpush1.msra.mxu0 0.0
    %222 = vmatprep.subr.mxu0 0.0
    %223 = vmatpush1.msra.mxu0 0.0
    %224 = vmatprep.subr.mxu0 0.0
    %225 = vmatpush1.msra.mxu0 0.0
    %226 = vmatprep.subr.mxu0 0.0
    %227 = vmatpush1.msra.mxu0 0.0
    %228 = vmatprep.subr.mxu0 0.0
    %229 = vmatpush1.msra.mxu0 0.0
    %230 = vmatprep.subr.mxu0 0.0
    %231 = vmatpush1.msra.mxu0 0.0
    %232 = vmatprep.subr.mxu0 0.0
    %233 = vmatpush1.msra.mxu0 0.0
    %234 = vmatprep.subr.mxu0 0.0
    %235 = vmatpush1.msra.mxu0 0.0
    %236 = vmatprep.subr.mxu0 0.0
    %237 = vmatpush1.msra.mxu0 0.0
    %238 = vmatprep.subr.mxu0 0.0
    %239 = vmatpush1.msra.mxu0 0.0
    %240 = vmatprep.subr.mxu0 0.0
    %241 = vmatpush1.msra.mxu0 0.0
    %242 = vmatprep.subr.mxu0 0.0
    %243 = vmatpush1.msra.mxu0 0.0
    %244 = vmatprep.subr.mxu0 0.0
    %245 = vmatpush1.msra.mxu0 0.0
    %246 = vmatprep.subr.mxu0 0.0
    %247 = vmatpush1.msra.mxu0 0.0
    %248 = vmatprep.subr.mxu0 0.0
    %249 = vmatpush1.msra.mxu0 0.0
    %250 = vmatprep.subr.mxu0 0.0
    %251 = vmatpush1.msra.mxu0 0.0
    %252 = vmatprep.subr.mxu0 0.0
    %253 = vmatpush1.msra.mxu0 0.0
    %254 = vmatprep.subr.mxu0 0.0
    %255 = vmatpush1.msra.mxu0 0.0
    %256 = vmatprep.subr.mxu0 0.0
    %257 = vmatpush1.msra.mxu0 0.0
    %258 = vmatprep.subr.mxu0 0.0
    %259 = vmatpush1.msra.mxu0 0.0
    %260 = vmatprep.subr.mxu0 0.0
    %261 = vmatpush1.msra.mxu0 0.0
    %262 = vmatprep.subr.mxu0 0.0
    %263 = vmatpush1.msra.mxu0 0.0
    %264 = vmatprep.subr.mxu0 0.0
    %265 = vmatpush1.msra.mxu0 0.0
    %266 = vmatprep.mubr.f32.mxu0 0.0
    %267 = vmatmul.mubr.f32.gmra.mrb[0].mxu0 %v105
    %v268 = vpop.f32.mrb[0].mxu0
    %v269 = vadd.f32 0.0, %v268
    %v270 = vpop.f32.mrb[0].mxu0
    %271 = vmatprep.mubr.f32.mxu0 0.0
    %272 = vmatmul.mubr.f32.gmra.mrb[0].mxu0 %v108
    %v273 = vpop.f32.mrb[0].mxu0
    %v274 = vadd.f32 0.0, %v273
    %v275 = vpop.f32.mrb[0].mxu0
    %276 = vmatprep.mubr.f32.mxu0 0.0
    %277 = vmatmul.mubr.f32.gmra.mrb[0].mxu0 %v111
    %v278 = vpop.f32.mrb[0].mxu0
    %v279 = vadd.f32 0.0, %v278
    %v280 = vpop.f32.mrb[0].mxu0
    %281 = vmatprep.mubr.f32.mxu0 0.0
    %282 = vmatmul.mubr.f32.gmra.mrb[0].mxu0 %v114
    %v283 = vpop.f32.mrb[0].mxu0
    %v284 = vadd.f32 0.0, %v283
    %v285 = vpop.f32.mrb[0].mxu0
    %286 = vdwg.mxu0
    %v287 = vld [vmem:[#allocation2] sm:$0xff]
    %v288 = vld [vmem:[#allocation2 + $0x8] sm:$0xff]
    %v289 = vld [vmem:[#allocation2 + $0x10] sm:$0xff]
    %v290 = vld [vmem:[#allocation2 + $0x18] sm:$0xff]
    %v291 = vld [vmem:[#allocation2 + $0x20] sm:$0xff]
    %v292 = vld [vmem:[#allocation2 + $0x28] sm:$0xff]
    %v293 = vld [vmem:[#allocation2 + $0x30] sm:$0xff]
    %v294 = vld [vmem:[#allocation2 + $0x38] sm:$0xff]
    %v295 = vld [vmem:[%s4] sm:$0xff]
    %v296 = vld [vmem:[%s4 + $0x8] sm:$0xff]
    %v297 = vld [vmem:[%s4 + $0x10] sm:$0xff]
    %v298 = vld [vmem:[%s4 + $0x18] sm:$0xff]
    %v299 = vld [vmem:[%s4 + $0x20] sm:$0xff]
    %v300 = vld [vmem:[%s4 + $0x28] sm:$0xff]
    %v301 = vld [vmem:[%s4 + $0x30] sm:$0xff]
    %v302 = vld [vmem:[%s4 + $0x38] sm:$0xff]
    %vm303 = vcmask 523264
    %v305 = vsel %vm303, %v287, 0
    %v308 = vsel %vm303, %v288, 0
    %v311 = vsel %vm303, %v289, 0
    %v314 = vsel %vm303, %v290, 0
    %v317 = vsel %vm303, %v291, 0
    %v320 = vsel %vm303, %v292, 0
    %v323 = vsel %vm303, %v293, 0
    %v326 = vsel %vm303, %v294, 0
    %328 = vmatprep.subr.mxu0 0.0
    %329 = vmatpush1.msra.mxu0 %v183
    %330 = vmatprep.subr.mxu0 0.0
    %331 = vmatpush1.msra.mxu0 %v188
    %332 = vmatprep.subr.mxu0 0.0
    %333 = vmatpush1.msra.mxu0 %v193
    %334 = vmatprep.subr.mxu0 0.0
    %335 = vmatpush1.msra.mxu0 %v198
    %336 = vmatprep.subr.mxu0 0.0
    %337 = vmatpush1.msra.mxu0 %v269
    %338 = vmatprep.subr.mxu0 0.0
    %339 = vmatpush1.msra.mxu0 %v274
    %340 = vmatprep.subr.mxu0 0.0
    %341 = vmatpush1.msra.mxu0 %v279
    %342 = vmatprep.subr.mxu0 0.0
    %343 = vmatpush1.msra.mxu0 %v284
    %344 = vmatprep.subr.mxu0 0.0
    %345 = vmatpush1.msra.mxu0 0.0
    %346 = vmatprep.subr.mxu0 0.0
    %347 = vmatpush1.msra.mxu0 0.0
    %348 = vmatprep.subr.mxu0 0.0
    %349 = vmatpush1.msra.mxu0 0.0
    %350 = vmatprep.subr.mxu0 0.0
    %351 = vmatpush1.msra.mxu0 0.0
    %352 = vmatprep.subr.mxu0 0.0
    %353 = vmatpush1.msra.mxu0 0.0
    %354 = vmatprep.subr.mxu0 0.0
    %355 = vmatpush1.msra.mxu0 0.0
    %356 = vmatprep.subr.mxu0 0.0
    %357 = vmatpush1.msra.mxu0 0.0
    %358 = vmatprep.subr.mxu0 0.0
    %359 = vmatpush1.msra.mxu0 0.0
    %360 = vmatprep.subr.mxu0 0.0
    %361 = vmatpush1.msra.mxu0 0.0
    %362 = vmatprep.subr.mxu0 0.0
    %363 = vmatpush1.msra.mxu0 0.0
    %364 = vmatprep.subr.mxu0 0.0
    %365 = vmatpush1.msra.mxu0 0.0
    %366 = vmatprep.subr.mxu0 0.0
    %367 = vmatpush1.msra.mxu0 0.0
    %368 = vmatprep.subr.mxu0 0.0
    %369 = vmatpush1.msra.mxu0 0.0
    %370 = vmatprep.subr.mxu0 0.0
    %371 = vmatpush1.msra.mxu0 0.0
    %372 = vmatprep.subr.mxu0 0.0
    %373 = vmatpush1.msra.mxu0 0.0
    %374 = vmatprep.subr.mxu0 0.0
    %375 = vmatpush1.msra.mxu0 0.0
    %376 = vmatprep.subr.mxu0 0.0
    %377 = vmatpush1.msra.mxu0 0.0
    %378 = vmatprep.subr.mxu0 0.0
    %379 = vmatpush1.msra.mxu0 0.0
    %380 = vmatprep.subr.mxu0 0.0
    %381 = vmatpush1.msra.mxu0 0.0
    %382 = vmatprep.subr.mxu0 0.0
    %383 = vmatpush1.msra.mxu0 0.0
    %384 = vmatprep.subr.mxu0 0.0
    %385 = vmatpush1.msra.mxu0 0.0
    %386 = vmatprep.subr.mxu0 0.0
    %387 = vmatpush1.msra.mxu0 0.0
    %388 = vmatprep.subr.mxu0 0.0
    %389 = vmatpush1.msra.mxu0 0.0
    %390 = vmatprep.subr.mxu0 0.0
    %391 = vmatpush1.msra.mxu0 0.0
    %392 = vmatprep.mubr.f32.mxu0 0.0
    %393 = vmatmul.mubr.f32.gmra.mrb[0].mxu0 %v305
    %v394 = vpop.f32.mrb[0].mxu0
    %v395 = vadd.f32 %v295, %v394
    %v396 = vpop.f32.mrb[0].mxu0
    %397 = vmatprep.mubr.f32.mxu0 0.0
    %398 = vmatmul.mubr.f32.gmra.mrb[0].mxu0 %v308
    %v399 = vpop.f32.mrb[0].mxu0
    %v400 = vadd.f32 %v296, %v399
    %v401 = vpop.f32.mrb[0].mxu0
    %402 = vmatprep.mubr.f32.mxu0 0.0
    %403 = vmatmul.mubr.f32.gmra.mrb[0].mxu0 %v311
    %v404 = vpop.f32.mrb[0].mxu0
    %v405 = vadd.f32 %v297, %v404
    %v406 = vpop.f32.mrb[0].mxu0
    %407 = vmatprep.mubr.f32.mxu0 0.0
    %408 = vmatmul.mubr.f32.gmra.mrb[0].mxu0 %v314
    %v409 = vpop.f32.mrb[0].mxu0
    %v410 = vadd.f32 %v298, %v409
    %v411 = vpop.f32.mrb[0].mxu0
    %412 = vmatprep.mubr.f32.mxu0 0.0
    %413 = vmatmul.mubr.f32.gmra.mrb[0].mxu0 %v317
    %v414 = vpop.f32.mrb[0].mxu0
    %v415 = vadd.f32 %v299, %v414
    %v416 = vpop.f32.mrb[0].mxu0
    %417 = vmatprep.mubr.f32.mxu0 0.0
    %418 = vmatmul.mubr.f32.gmra.mrb[0].mxu0 %v320
    %v419 = vpop.f32.mrb[0].mxu0
    %v420 = vadd.f32 %v300, %v419
    %v421 = vpop.f32.mrb[0].mxu0
    %422 = vmatprep.mubr.f32.mxu0 0.0
    %423 = vmatmul.mubr.f32.gmra.mrb[0].mxu0 %v323
    %v424 = vpop.f32.mrb[0].mxu0
    %v425 = vadd.f32 %v301, %v424
    %v426 = vpop.f32.mrb[0].mxu0
    %427 = vmatprep.mubr.f32.mxu0 0.0
    %428 = vmatmul.mubr.f32.gmra.mrb[0].mxu0 %v326
    %v429 = vpop.f32.mrb[0].mxu0
    %v430 = vadd.f32 %v302, %v429
    %v431 = vpop.f32.mrb[0].mxu0
    %432 = vdwg.mxu0
    %v433 = vxor.u32 %v395, 2147483648
    %v434 = vxor.u32 %v400, 2147483648
    %v435 = vxor.u32 %v405, 2147483648
    %v436 = vxor.u32 %v410, 2147483648
    %v437 = vxor.u32 %v415, 2147483648
    %v438 = vxor.u32 %v420, 2147483648
    %v439 = vxor.u32 %v425, 2147483648
    %v440 = vxor.u32 %v430, 2147483648
    %v441 = vmul.f32 %v433, 1.442695
    %v442 = vpow.pop %v441
    %v443 = vmul.f32 %v434, 1.442695
    %v444 = vpow.pop %v443
    %v445 = vmul.f32 %v435, 1.442695
    %v446 = vpow.pop %v445
    %v447 = vmul.f32 %v436, 1.442695
    %v448 = vpow.pop %v447
    %v449 = vmul.f32 %v437, 1.442695
    %v450 = vpow.pop %v449
    %v451 = vmul.f32 %v438, 1.442695
    %v452 = vpow.pop %v451
    %v453 = vmul.f32 %v439, 1.442695
    %v454 = vpow.pop %v453
    %v455 = vmul.f32 %v440, 1.442695
    %v456 = vpow.pop %v455
    %v457 = vadd.f32 %v442, 1.0
    %v458 = vadd.f32 %v444, 1.0
    %v459 = vadd.f32 %v446, 1.0
    %v460 = vadd.f32 %v448, 1.0
    %v461 = vadd.f32 %v450, 1.0
    %v462 = vadd.f32 %v452, 1.0
    %v463 = vadd.f32 %v454, 1.0
    %v464 = vadd.f32 %v456, 1.0
    %v465 = vrcp.pop %v457
    %v466 = vmul.f32 1.0, %v465
    %v467 = vrcp.pop %v458
    %v468 = vmul.f32 1.0, %v467
    %v469 = vrcp.pop %v459
    %v470 = vmul.f32 1.0, %v469
    %v471 = vrcp.pop %v460
    %v472 = vmul.f32 1.0, %v471
    %v473 = vrcp.pop %v461
    %v474 = vmul.f32 1.0, %v473
    %v475 = vrcp.pop %v462
    %v476 = vmul.f32 1.0, %v475
    %v477 = vrcp.pop %v463
    %v478 = vmul.f32 1.0, %v477
    %v479 = vrcp.pop %v464
    %v480 = vmul.f32 1.0, %v479
    %v481 = vld [vmem:[#allocation8] sm:$0xff]
    %v482 = vld [vmem:[#allocation8 + $0x8] sm:$0xff]
    %v483 = vld [vmem:[#allocation8 + $0x10] sm:$0xff]
    %v484 = vld [vmem:[#allocation8 + $0x18] sm:$0xff]
    %v485 = vld [vmem:[%s7] sm:$0x1]
    %v486 = vlaneseq
    %v487 = vshrl.u32 %v486, 7
    %v488 = vsub.s32 0, %v487
    %v489 = vrot.slane %v485, %v488
    %vm490 = vcmask 261120
    %v492 = vsel %vm490, %v466, 0
    %v495 = vsel %vm490, %v468, 0
    %v498 = vsel %vm490, %v470, 0
    %v501 = vsel %vm490, %v472, 0
    %v504 = vsel %vm490, %v474, 0
    %v507 = vsel %vm490, %v476, 0
    %v510 = vsel %vm490, %v478, 0
    %v513 = vsel %vm490, %v480, 0
    %515 = vmatprep.subr.mxu0 0.0
    %516 = vmatpush1.msra.mxu0 %v481
    %517 = vmatprep.subr.mxu0 0.0
    %518 = vmatpush1.msra.mxu0 %v482
    %519 = vmatprep.subr.mxu0 0.0
    %520 = vmatpush1.msra.mxu0 %v483
    %521 = vmatprep.subr.mxu0 0.0
    %522 = vmatpush1.msra.mxu0 %v484
    %523 = vmatprep.subr.mxu0 0.0
    %524 = vmatpush1.msra.mxu0 0.0
    %525 = vmatprep.subr.mxu0 0.0
    %526 = vmatpush1.msra.mxu0 0.0
    %527 = vmatprep.subr.mxu0 0.0
    %528 = vmatpush1.msra.mxu0 0.0
    %529 = vmatprep.subr.mxu0 0.0
    %530 = vmatpush1.msra.mxu0 0.0
    %531 = vmatprep.subr.mxu0 0.0
    %532 = vmatpush1.msra.mxu0 0.0
    %533 = vmatprep.subr.mxu0 0.0
    %534 = vmatpush1.msra.mxu0 0.0
    %535 = vmatprep.subr.mxu0 0.0
    %536 = vmatpush1.msra.mxu0 0.0
    %537 = vmatprep.subr.mxu0 0.0
    %538 = vmatpush1.msra.mxu0 0.0
    %539 = vmatprep.subr.mxu0 0.0
    %540 = vmatpush1.msra.mxu0 0.0
    %541 = vmatprep.subr.mxu0 0.0
    %542 = vmatpush1.msra.mxu0 0.0
    %543 = vmatprep.subr.mxu0 0.0
    %544 = vmatpush1.msra.mxu0 0.0
    %545 = vmatprep.subr.mxu0 0.0
    %546 = vmatpush1.msra.mxu0 0.0
    %547 = vmatprep.subr.mxu0 0.0
    %548 = vmatpush1.msra.mxu0 0.0
    %549 = vmatprep.subr.mxu0 0.0
    %550 = vmatpush1.msra.mxu0 0.0
    %551 = vmatprep.subr.mxu0 0.0
    %552 = vmatpush1.msra.mxu0 0.0
    %553 = vmatprep.subr.mxu0 0.0
    %554 = vmatpush1.msra.mxu0 0.0
    %555 = vmatprep.subr.mxu0 0.0
    %556 = vmatpush1.msra.mxu0 0.0
    %557 = vmatprep.subr.mxu0 0.0
    %558 = vmatpush1.msra.mxu0 0.0
    %559 = vmatprep.subr.mxu0 0.0
    %560 = vmatpush1.msra.mxu0 0.0
    %561 = vmatprep.subr.mxu0 0.0
    %562 = vmatpush1.msra.mxu0 0.0
    %563 = vmatprep.subr.mxu0 0.0
    %564 = vmatpush1.msra.mxu0 0.0
    %565 = vmatprep.subr.mxu0 0.0
    %566 = vmatpush1.msra.mxu0 0.0
    %567 = vmatprep.subr.mxu0 0.0
    %568 = vmatpush1.msra.mxu0 0.0
    %569 = vmatprep.subr.mxu0 0.0
    %570 = vmatpush1.msra.mxu0 0.0
    %571 = vmatprep.subr.mxu0 0.0
    %572 = vmatpush1.msra.mxu0 0.0
    %573 = vmatprep.subr.mxu0 0.0
    %574 = vmatpush1.msra.mxu0 0.0
    %575 = vmatprep.subr.mxu0 0.0
    %576 = vmatpush1.msra.mxu0 0.0
    %577 = vmatprep.subr.mxu0 0.0
    %578 = vmatpush1.msra.mxu0 0.0
    %579 = vmatprep.mubr.f32.mxu0 0.0
    %580 = vmatmul.mubr.f32.gmra.mrb[0].mxu0 %v492
    %v581 = vpop.f32.mrb[0].mxu0
    %v582 = vadd.f32 %v489, %v581
    %v583 = vpop.f32.mrb[0].mxu0
    %584 = vmatprep.mubr.f32.mxu0 0.0
    %585 = vmatmul.mubr.f32.gmra.mrb[0].mxu0 %v495
    %v586 = vpop.f32.mrb[0].mxu0
    %v587 = vadd.f32 %v489, %v586
    %v588 = vpop.f32.mrb[0].mxu0
    %589 = vmatprep.mubr.f32.mxu0 0.0
    %590 = vmatmul.mubr.f32.gmra.mrb[0].mxu0 %v498
    %v591 = vpop.f32.mrb[0].mxu0
    %v592 = vadd.f32 %v489, %v591
    %v593 = vpop.f32.mrb[0].mxu0
    %594 = vmatprep.mubr.f32.mxu0 0.0
    %595 = vmatmul.mubr.f32.gmra.mrb[0].mxu0 %v501
    %v596 = vpop.f32.mrb[0].mxu0
    %v597 = vadd.f32 %v489, %v596
    %v598 = vpop.f32.mrb[0].mxu0
    %599 = vmatprep.mubr.f32.mxu0 0.0
    %600 = vmatmul.mubr.f32.gmra.mrb[0].mxu0 %v504
    %v601 = vpop.f32.mrb[0].mxu0
    %v602 = vadd.f32 %v489, %v601
    %v603 = vpop.f32.mrb[0].mxu0
    %604 = vmatprep.mubr.f32.mxu0 0.0
    %605 = vmatmul.mubr.f32.gmra.mrb[0].mxu0 %v507
    %v606 = vpop.f32.mrb[0].mxu0
    %v607 = vadd.f32 %v489, %v606
    %v608 = vpop.f32.mrb[0].mxu0
    %609 = vmatprep.mubr.f32.mxu0 0.0
    %610 = vmatmul.mubr.f32.gmra.mrb[0].mxu0 %v510
    %v611 = vpop.f32.mrb[0].mxu0
    %v612 = vadd.f32 %v489, %v611
    %v613 = vpop.f32.mrb[0].mxu0
    %614 = vmatprep.mubr.f32.mxu0 0.0
    %615 = vmatmul.mubr.f32.gmra.mrb[0].mxu0 %v513
    %v616 = vpop.f32.mrb[0].mxu0
    %v617 = vadd.f32 %v489, %v616
    %v618 = vpop.f32.mrb[0].mxu0
    %619 = vdwg.mxu0
    %v620 = vxor.u32 %v582, 2147483648
    %v621 = vxor.u32 %v587, 2147483648
    %v622 = vxor.u32 %v592, 2147483648
    %v623 = vxor.u32 %v597, 2147483648
    %v624 = vxor.u32 %v602, 2147483648
    %v625 = vxor.u32 %v607, 2147483648
    %v626 = vxor.u32 %v612, 2147483648
    %v627 = vxor.u32 %v617, 2147483648
    %v628 = vmul.f32 %v620, 1.442695
    %v629 = vpow.pop %v628
    %v630 = vmul.f32 %v621, 1.442695
    %v631 = vpow.pop %v630
    %v632 = vmul.f32 %v622, 1.442695
    %v633 = vpow.pop %v632
    %v634 = vmul.f32 %v623, 1.442695
    %v635 = vpow.pop %v634
    %v636 = vmul.f32 %v624, 1.442695
    %v637 = vpow.pop %v636
    %v638 = vmul.f32 %v625, 1.442695
    %v639 = vpow.pop %v638
    %v640 = vmul.f32 %v626, 1.442695
    %v641 = vpow.pop %v640
    %v642 = vmul.f32 %v627, 1.442695
    %v643 = vpow.pop %v642
    %v644 = vadd.f32 %v629, 1.0
    %v645 = vadd.f32 %v631, 1.0
    %v646 = vadd.f32 %v633, 1.0
    %v647 = vadd.f32 %v635, 1.0
    %v648 = vadd.f32 %v637, 1.0
    %v649 = vadd.f32 %v639, 1.0
    %v650 = vadd.f32 %v641, 1.0
    %v651 = vadd.f32 %v643, 1.0
    %v652 = vrcp.pop %v644
    %v653 = vmul.f32 1.0, %v652
    %v654 = vrcp.pop %v645
    %v655 = vmul.f32 1.0, %v654
    %v656 = vrcp.pop %v646
    %v657 = vmul.f32 1.0, %v656
    %v658 = vrcp.pop %v647
    %v659 = vmul.f32 1.0, %v658
    %v660 = vrcp.pop %v648
    %v661 = vmul.f32 1.0, %v660
    %v662 = vrcp.pop %v649
    %v663 = vmul.f32 1.0, %v662
    %v664 = vrcp.pop %v650
    %v665 = vmul.f32 1.0, %v664
    %v666 = vrcp.pop %v651
    %v667 = vmul.f32 1.0, %v666
    %v668 = vld [vmem:[#allocation5] sm:$0xff]
    %v669 = vld [vmem:[#allocation5 + $0x8] sm:$0xff]
    %v670 = vld [vmem:[#allocation5 + $0x10] sm:$0xff]
    %v671 = vld [vmem:[#allocation5 + $0x18] sm:$0xff]
    %v673 = vsel %vm303, %v668, 0
    %v676 = vsel %vm303, %v669, 0
    %v679 = vsel %vm303, %v670, 0
    %v682 = vsel %vm303, %v671, 0
    %684 = vmatprep.subr.mxu0 0.0
    %685 = vmatpush1.msra.mxu0 %v653
    %686 = vmatprep.subr.mxu0 0.0
    %687 = vmatpush1.msra.mxu0 %v655
    %688 = vmatprep.subr.mxu0 0.0
    %689 = vmatpush1.msra.mxu0 %v657
    %690 = vmatprep.subr.mxu0 0.0
    %691 = vmatpush1.msra.mxu0 %v659
    %692 = vmatprep.subr.mxu0 0.0
    %693 = vmatpush1.msra.mxu0 %v661
    %694 = vmatprep.subr.mxu0 0.0
    %695 = vmatpush1.msra.mxu0 %v663
    %696 = vmatprep.subr.mxu0 0.0
    %697 = vmatpush1.msra.mxu0 %v665
    %698 = vmatprep.subr.mxu0 0.0
    %699 = vmatpush1.msra.mxu0 %v667
    %700 = vmatprep.subr.mxu0 0.0
    %701 = vmatpush1.msra.mxu0 0.0
    %702 = vmatprep.subr.mxu0 0.0
    %703 = vmatpush1.msra.mxu0 0.0
    %704 = vmatprep.subr.mxu0 0.0
    %705 = vmatpush1.msra.mxu0 0.0
    %706 = vmatprep.subr.mxu0 0.0
    %707 = vmatpush1.msra.mxu0 0.0
    %708 = vmatprep.subr.mxu0 0.0
    %709 = vmatpush1.msra.mxu0 0.0
    %710 = vmatprep.subr.mxu0 0.0
    %711 = vmatpush1.msra.mxu0 0.0
    %712 = vmatprep.subr.mxu0 0.0
    %713 = vmatpush1.msra.mxu0 0.0
    %714 = vmatprep.subr.mxu0 0.0
    %715 = vmatpush1.msra.mxu0 0.0
    %716 = vmatprep.subr.mxu0 0.0
    %717 = vmatpush1.msra.mxu0 0.0
    %718 = vmatprep.subr.mxu0 0.0
    %719 = vmatpush1.msra.mxu0 0.0
    %720 = vmatprep.subr.mxu0 0.0
    %721 = vmatpush1.msra.mxu0 0.0
    %722 = vmatprep.subr.mxu0 0.0
    %723 = vmatpush1.msra.mxu0 0.0
    %724 = vmatprep.subr.mxu0 0.0
    %725 = vmatpush1.msra.mxu0 0.0
    %726 = vmatprep.subr.mxu0 0.0
    %727 = vmatpush1.msra.mxu0 0.0
    %728 = vmatprep.subr.mxu0 0.0
    %729 = vmatpush1.msra.mxu0 0.0
    %730 = vmatprep.subr.mxu0 0.0
    %731 = vmatpush1.msra.mxu0 0.0
    %732 = vmatprep.subr.mxu0 0.0
    %733 = vmatpush1.msra.mxu0 0.0
    %734 = vmatprep.subr.mxu0 0.0
    %735 = vmatpush1.msra.mxu0 0.0
    %736 = vmatprep.subr.mxu0 0.0
    %737 = vmatpush1.msra.mxu0 0.0
    %738 = vmatprep.subr.mxu0 0.0
    %739 = vmatpush1.msra.mxu0 0.0
    %740 = vmatprep.subr.mxu0 0.0
    %741 = vmatpush1.msra.mxu0 0.0
    %742 = vmatprep.subr.mxu0 0.0
    %743 = vmatpush1.msra.mxu0 0.0
    %744 = vmatprep.subr.mxu0 0.0
    %745 = vmatpush1.msra.mxu0 0.0
    %746 = vmatprep.subr.mxu0 0.0
    %747 = vmatpush1.msra.mxu0 0.0
    %748 = vmatprep.mubr.f32.mxu0 0.0
    %749 = vmatmul.mubr.f32.gmra.mrb[0].mxu0 %v673
    %v750 = vpop.f32.mrb[0].mxu0
    %v751 = vadd.f32 0.0, %v750
    %v752 = vpop.f32.mrb[0].mxu0
    %753 = vmatprep.mubr.f32.mxu0 0.0
    %754 = vmatmul.mubr.f32.gmra.mrb[0].mxu0 %v676
    %v755 = vpop.f32.mrb[0].mxu0
    %v756 = vadd.f32 0.0, %v755
    %v757 = vpop.f32.mrb[0].mxu0
    %758 = vmatprep.mubr.f32.mxu0 0.0
    %759 = vmatmul.mubr.f32.gmra.mrb[0].mxu0 %v679
    %v760 = vpop.f32.mrb[0].mxu0
    %v761 = vadd.f32 0.0, %v760
    %v762 = vpop.f32.mrb[0].mxu0
    %763 = vmatprep.mubr.f32.mxu0 0.0
    %764 = vmatmul.mubr.f32.gmra.mrb[0].mxu0 %v682
    %v765 = vpop.f32.mrb[0].mxu0
    %v766 = vadd.f32 0.0, %v765
    %v767 = vpop.f32.mrb[0].mxu0
    %768 = vdwg.mxu0
    %v769 = vld [vmem:[#allocation10] sm:$0xff]
    %v770 = vld [vmem:[#allocation10 + $0x8] sm:$0xff]
    %v771 = vld [vmem:[#allocation10 + $0x10] sm:$0xff]
    %v772 = vld [vmem:[#allocation10 + $0x18] sm:$0x3f]
    %v773 = vld [vmem:[%s7 + $0x1] sm:$0x1]
    %v774 = vlaneseq
    %v775 = vshrl.u32 %v774, 7
    %v776 = vsub.s32 0, %v775
    %v777 = vrot.slane %v773, %v776
    %vm778 = vcmask 244736
    %v780 = vsel %vm778, %v751, 0
    %v783 = vsel %vm778, %v756, 0
    %v786 = vsel %vm778, %v761, 0
    %v789 = vsel %vm778, %v766, 0
    %vm791 = vcmask 1045504
    %v793 = vsel %vm791, %v772, 0
    %795 = vmatprep.subr.mxu0 0.0
    %796 = vmatpush1.msra.mxu0 %v769
    %797 = vmatprep.subr.mxu0 0.0
    %798 = vmatpush1.msra.mxu0 %v770
    %799 = vmatprep.subr.mxu0 0.0
    %800 = vmatpush1.msra.mxu0 %v771
    %801 = vmatprep.subr.mxu0 0.0
    %802 = vmatpush1.msra.mxu0 %v793
    %803 = vmatprep.subr.mxu0 0.0
    %804 = vmatpush1.msra.mxu0 0.0
    %805 = vmatprep.subr.mxu0 0.0
    %806 = vmatpush1.msra.mxu0 0.0
    %807 = vmatprep.subr.mxu0 0.0
    %808 = vmatpush1.msra.mxu0 0.0
    %809 = vmatprep.subr.mxu0 0.0
    %810 = vmatpush1.msra.mxu0 0.0
    %811 = vmatprep.subr.mxu0 0.0
    %812 = vmatpush1.msra.mxu0 0.0
    %813 = vmatprep.subr.mxu0 0.0
    %814 = vmatpush1.msra.mxu0 0.0
    %815 = vmatprep.subr.mxu0 0.0
    %816 = vmatpush1.msra.mxu0 0.0
    %817 = vmatprep.subr.mxu0 0.0
    %818 = vmatpush1.msra.mxu0 0.0
    %819 = vmatprep.subr.mxu0 0.0
    %820 = vmatpush1.msra.mxu0 0.0
    %821 = vmatprep.subr.mxu0 0.0
    %822 = vmatpush1.msra.mxu0 0.0
    %823 = vmatprep.subr.mxu0 0.0
    %824 = vmatpush1.msra.mxu0 0.0
    %825 = vmatprep.subr.mxu0 0.0
    %826 = vmatpush1.msra.mxu0 0.0
    %827 = vmatprep.subr.mxu0 0.0
    %828 = vmatpush1.msra.mxu0 0.0
    %829 = vmatprep.subr.mxu0 0.0
    %830 = vmatpush1.msra.mxu0 0.0
    %831 = vmatprep.subr.mxu0 0.0
    %832 = vmatpush1.msra.mxu0 0.0
    %833 = vmatprep.subr.mxu0 0.0
    %834 = vmatpush1.msra.mxu0 0.0
    %835 = vmatprep.subr.mxu0 0.0
    %836 = vmatpush1.msra.mxu0 0.0
    %837 = vmatprep.subr.mxu0 0.0
    %838 = vmatpush1.msra.mxu0 0.0
    %839 = vmatprep.subr.mxu0 0.0
    %840 = vmatpush1.msra.mxu0 0.0
    %841 = vmatprep.subr.mxu0 0.0
    %842 = vmatpush1.msra.mxu0 0.0
    %843 = vmatprep.subr.mxu0 0.0
    %844 = vmatpush1.msra.mxu0 0.0
    %845 = vmatprep.subr.mxu0 0.0
    %846 = vmatpush1.msra.mxu0 0.0
    %847 = vmatprep.subr.mxu0 0.0
    %848 = vmatpush1.msra.mxu0 0.0
    %849 = vmatprep.subr.mxu0 0.0
    %850 = vmatpush1.msra.mxu0 0.0
    %851 = vmatprep.subr.mxu0 0.0
    %852 = vmatpush1.msra.mxu0 0.0
    %853 = vmatprep.subr.mxu0 0.0
    %854 = vmatpush1.msra.mxu0 0.0
    %855 = vmatprep.subr.mxu0 0.0
    %856 = vmatpush1.msra.mxu0 0.0
    %857 = vmatprep.subr.mxu0 0.0
    %858 = vmatpush1.msra.mxu0 0.0
    %859 = vmatprep.mubr.f32.mxu0 0.0
    %860 = vmatmul.mubr.f32.gmra.mrb[0].mxu0 %v780
    %v861 = vpop.f32.mrb[0].mxu0
    %v862 = vadd.f32 %v777, %v861
    %v863 = vpop.f32.mrb[0].mxu0
    %864 = vmatprep.mubr.f32.mxu0 0.0
    %865 = vmatmul.mubr.f32.gmra.mrb[0].mxu0 %v783
    %v866 = vpop.f32.mrb[0].mxu0
    %v867 = vadd.f32 %v777, %v866
    %v868 = vpop.f32.mrb[0].mxu0
    %869 = vmatprep.mubr.f32.mxu0 0.0
    %870 = vmatmul.mubr.f32.gmra.mrb[0].mxu0 %v786
    %v871 = vpop.f32.mrb[0].mxu0
    %v872 = vadd.f32 %v777, %v871
    %v873 = vpop.f32.mrb[0].mxu0
    %874 = vmatprep.mubr.f32.mxu0 0.0
    %875 = vmatmul.mubr.f32.gmra.mrb[0].mxu0 %v789
    %v876 = vpop.f32.mrb[0].mxu0
    %v877 = vadd.f32 %v777, %v876
    %v878 = vpop.f32.mrb[0].mxu0
    %879 = vdwg.mxu0
    %v880 = vxor.u32 %v862, 2147483648
    %v881 = vxor.u32 %v867, 2147483648
    %v882 = vxor.u32 %v872, 2147483648
    %v883 = vxor.u32 %v877, 2147483648
    %v884 = vmul.f32 %v880, 1.442695
    %v885 = vpow.pop %v884
    %v886 = vmul.f32 %v881, 1.442695
    %v887 = vpow.pop %v886
    %v888 = vmul.f32 %v882, 1.442695
    %v889 = vpow.pop %v888
    %v890 = vmul.f32 %v883, 1.442695
    %v891 = vpow.pop %v890
    %v892 = vadd.f32 %v885, 1.0
    %v893 = vadd.f32 %v887, 1.0
    %v894 = vadd.f32 %v889, 1.0
    %v895 = vadd.f32 %v891, 1.0
    %v896 = vrcp.pop %v892
    %v897 = vmul.f32 1.0, %v896
    %v898 = vrcp.pop %v893
    %v899 = vmul.f32 1.0, %v898
    %v900 = vrcp.pop %v894
    %v901 = vmul.f32 1.0, %v900
    %v902 = vrcp.pop %v895
    %v903 = vmul.f32 1.0, %v902
    %vm904 = vcmask 130048
    %905 = vst.msk [vmem:[#allocation11] sm:$0xff] %vm904, %v897
    %906 = vst.msk [vmem:[#allocation11 + $0x8] sm:$0xff] %vm904, %v899
    %907 = vst.msk [vmem:[#allocation11 + $0x10] sm:$0xff] %vm904, %v901
    %908 = vst.msk [vmem:[#allocation11 + $0x18] sm:$0xff] %vm904, %v903
    // Predicated region
    $region54: #{forward.1} parent=1 // pred_check
      _
    $region55: #{forward.1} parent=1 // pred_check_branch
      %910 = sbr.rel (0) target = $region57
    $region56: #{forward.1} parent=1 // pred_region
      %s912 = ssub.s32 512, 512
      %913 = vsyncadd [#allocation4], %s912
      %s914 = sshll.u32 [#allocation11], 4
      %s915 = int_to_ptr.vmem [resolvable:$true] %s914
      %920 = dma.vmem_to_hbm [thread:$0]  %s915, 512, %s8, [#allocation4], 128, 128, 8
    $region57: #{forward.1} parent=1 // pred_fallthru
      _
    // Predicated region
    $region58: #{forward.1} parent=1 // pred_check
      _
    $region59: #{forward.1} parent=1 // pred_check_branch
      %922 = sbr.rel (0) target = $region61
    $region60: #{forward.1} parent=1 // pred_region
      %923 = dma.done [#allocation4], 512
    $region61: #{forward.1} parent=1 // pred_fallthru
      _
    %924 = vsyncpa [#allocation3], 1
    %925 = vsyncpa [#allocation6], 1
    %926 = vsyncpa [#allocation9], 1
    %927 = vsyncpa [#allocation4], 1

</llo_original>
